<compile_context>
chip_gen: v7x
topology: tpu7x:2x2x1
jax: 0.10.0
libtpu: 0.0.40
codegen_flags: <defaults>
</compile_context>

<pallas_src>
import jax
import jax.numpy as jnp
from jax.experimental import pallas as pl
from jax.experimental.pallas import tpu as pltpu

LANES = 128  # TPU lane width; all packed blocks are padded to 128 lanes.


def _round_up(n, m):
    return ((n + m - 1) // m) * m


def _layout(in_dim):
    """Row offsets of each parameter block inside the packed (rows, 128) slab.

    Every block starts on a multiple of 8 rows so in-kernel slices are
    sublane-aligned.  Weight matrices whose contraction dim feeds a padded
    (B, 128) activation are padded to 128 rows (extra rows are zero, so the
    math is unchanged).
    """
    off = {}
    r = 0
    off["w1"] = r; r += _round_up(in_dim, 8)   # (in_dim, 128)
    off["b1"] = r; r += 8                      # (1, 128) in an 8-row block
    off["w2"] = r; r += LANES                  # (128, 128)
    off["b2"] = r; r += 8
    off["w3"] = r; r += LANES
    off["b3"] = r; r += 8
    off["wh"] = r; r += LANES                  # fused V|A head weights
    off["bh"] = r; r += 8                      # fused V|A head biases
    return off, r


def pack_params(params):
    """One-time packing of all weights/biases into a single lane-dense f32 slab."""
    in_dim = params["w1"].shape[0]
    for w in ("w1", "w2", "w3"):
        assert params[w].shape[1] <= LANES, "hidden sizes must be <= 128 lanes"
    w_head = jnp.concatenate([params["wv"], params["wa"]], axis=1)  # (h3, 1+A)
    b_head = jnp.concatenate([params["bv"], params["ba"]], axis=1)  # (1, 1+A)
    assert w_head.shape[1] <= LANES

    off, rows = _layout(in_dim)
    buf = jnp.zeros((rows, LANES), jnp.float32)

    def put(b, o, mat):
        r, c = mat.shape
        return b.at[o:o + r, 0:c].set(mat.astype(jnp.float32))

    buf = put(buf, off["w1"], params["w1"])
    buf = put(buf, off["b1"], params["b1"])
    buf = put(buf, off["w2"], params["w2"])
    buf = put(buf, off["b2"], params["b2"])
    buf = put(buf, off["w3"], params["w3"])
    buf = put(buf, off["b3"], params["b3"])
    buf = put(buf, off["wh"], w_head)
    buf = put(buf, off["bh"], b_head)
    return buf


def _make_kernel(in_dim, off):
    bf16, f32 = jnp.bfloat16, jnp.float32

    def kernel(x_ref, p_ref, out_ref):
        # fc_1 + ReLU  -- bf16 MXU operands, f32 accumulation, f32 elementwise.
        x = x_ref[...].astype(bf16)                                   # (B, in_dim)
        w1 = p_ref[off["w1"]:off["w1"] + in_dim, :].astype(bf16)      # (in_dim, 128)
        h = jnp.dot(x, w1, preferred_element_type=f32)                # (B, 128)
        h = jnp.maximum(h + p_ref[off["b1"]:off["b1"] + 1, :], 0.0)
        # fc_2 + ReLU
        w2 = p_ref[off["w2"]:off["w2"] + LANES, :].astype(bf16)
        h = jnp.dot(h.astype(bf16), w2, preferred_element_type=f32)
        h = jnp.maximum(h + p_ref[off["b2"]:off["b2"] + 1, :], 0.0)
        # fc_3 + ReLU
        w3 = p_ref[off["w3"]:off["w3"] + LANES, :].astype(bf16)
        h = jnp.dot(h.astype(bf16), w3, preferred_element_type=f32)
        h = jnp.maximum(h + p_ref[off["b3"]:off["b3"] + 1, :], 0.0)
        # fused V|A head (lane 0 = V, lanes 1..num_actions = A, rest zero-padded)
        wh = p_ref[off["wh"]:off["wh"] + LANES, :].astype(bf16)
        out = jnp.dot(h.astype(bf16), wh, preferred_element_type=f32)
        out_ref[...] = out + p_ref[off["bh"]:off["bh"] + 1, :]

    return kernel


def dqn_forward(state, packed, *, num_actions):
    """state: (B, dimension**2) f32; packed: output of pack_params(). Returns (V, A)."""
    B, in_dim = state.shape
    off, rows = _layout(in_dim)
    assert packed.shape == (rows, LANES)

    out = pl.pallas_call(
        _make_kernel(in_dim, off),
        out_shape=jax.ShapeDtypeStruct((B, LANES), jnp.float32),
        in_specs=[
            pl.BlockSpec(memory_space=pltpu.MemorySpace.VMEM),
            pl.BlockSpec(memory_space=pltpu.MemorySpace.VMEM),
        ],
        out_specs=pl.BlockSpec(memory_space=pltpu.MemorySpace.VMEM),
    )(state, packed)

    return out[:, 0:1], out[:, 1:1 + num_actions]


def init_params(key, in_dim, fc_sizes, num_actions):
    """Deterministic synthetic parameters (PyTorch-Linear init), stored as (in, out)."""
    dims = [in_dim, fc_sizes[0], fc_sizes[1], fc_sizes[2]]
    params = {}
    keys = jax.random.split(key, 10)

    def linear(kw, kb, fan_in, fan_out):
        bound = 1.0 / jnp.sqrt(fan_in)
        w = jax.random.uniform(kw, (fan_in, fan_out), jnp.float32, -bound, bound)
        b = jax.random.uniform(kb, (1, fan_out), jnp.float32, -bound, bound)
        return w, b

    params["w1"], params["b1"] = linear(keys[0], keys[1], dims[0], dims[1])
    params["w2"], params["b2"] = linear(keys[2], keys[3], dims[1], dims[2])
    params["w3"], params["b3"] = linear(keys[4], keys[5], dims[2], dims[3])
    params["wv"], params["bv"] = linear(keys[6], keys[7], dims[3], 1)
    params["wa"], params["ba"] = linear(keys[8], keys[9], dims[3], num_actions)
    return params


def reference_forward_bf16(state, p):
    """Mirrors the kernel math: bf16 matmul operands, f32 accumulation."""
    bf = lambda t: t.astype(jnp.bfloat16)
    lin = lambda x, w, b: jnp.dot(bf(x), bf(w), preferred_element_type=jnp.float32) + b
    relu = lambda t: jnp.maximum(t, 0.0)
    h = relu(lin(state, p["w1"], p["b1"]))
    h = relu(lin(h, p["w2"], p["b2"]))
    h = relu(lin(h, p["w3"], p["b3"]))
    return lin(h, p["wv"], p["bv"]), lin(h, p["wa"], p["ba"])


def reference_forward_f32(state, p):
    relu = lambda t: jnp.maximum(t, 0.0)
    h = relu(state @ p["w1"] + p["b1"])
    h = relu(h @ p["w2"] + p["b2"])
    h = relu(h @ p["w3"] + p["b3"])
    return h @ p["wv"] + p["bv"], h @ p["wa"] + p["ba"]


if __name__ == "__main__":
    # Small shapes consistent with the module: dimension=4 -> input dim 16,
    # fc_sizes=[64, 64, 32] (cfg.learning_hyperparameters stand-in), num_actions=4.
    batch = 8
    dimension = 4
    fc_sizes = [64, 64, 32]
    num_actions = 4

    key = jax.random.PRNGKey(0)
    k_state, k_params = jax.random.split(key)
    state = jax.random.normal(k_state, (batch, dimension ** 2), jnp.float32)
    params = init_params(k_params, dimension ** 2, fc_sizes, num_actions)

    packed = pack_params(params)  # one-time packing, outside the hot path

    V, A = dqn_forward(state, packed, num_actions=num_actions)
    V, A = jax.block_until_ready((V, A))

    V_bf, A_bf = reference_forward_bf16(state, params)
    V_f32, A_f32 = reference_forward_f32(state, params)

    assert V.shape == (batch, 1) and A.shape == (batch, num_actions)
    # Same math as the kernel (bf16 operands, f32 accumulation): tight tolerance.
    assert jnp.allclose(V, V_bf, atol=2e-2, rtol=2e-2)
    assert jnp.allclose(A, A_bf, atol=2e-2, rtol=2e-2)
    # Pure-f32 reference: loose tolerance for bf16 matmul-operand rounding.
    assert jnp.allclose(V, V_f32, atol=5e-2, rtol=5e-2)
    assert jnp.allclose(A, A_f32, atol=5e-2, rtol=5e-2)

    print("KERNEL_OK")
</pallas_src>

<mosaic_0001>
module attributes {stable_mosaic.version = 11 : i64} {
  func.func @kernel(%arg0: memref<8x16xf32, #tpu.memory_space<vmem>>, %arg1: memref<432x128xf32, #tpu.memory_space<vmem>>, %arg2: memref<8x128xf32, #tpu.memory_space<vmem>>) attributes {dimension_semantics = [], scalar_prefetch = 0 : i64, scratch_operands = 0 : i64, tpu.core_type = #tpu.core_type<tc>} {
    %c0 = arith.constant 0 : index
    %c0_0 = arith.constant 0 : index
    %0 = vector.load %arg0[%c0, %c0_0] : memref<8x16xf32, #tpu.memory_space<vmem>>, vector<8x16xf32>
    %1 = arith.truncf %0 : vector<8x16xf32> to vector<8x16xbf16>
    %c0_1 = arith.constant 0 : index
    %c0_2 = arith.constant 0 : index
    %2 = vector.load %arg1[%c0_1, %c0_2] : memref<432x128xf32, #tpu.memory_space<vmem>>, vector<16x128xf32>
    %3 = arith.truncf %2 : vector<16x128xf32> to vector<16x128xbf16>
    %cst = arith.constant dense<0.000000e+00> : vector<8x128xf32>
    %4 = tpu.matmul %1, %3, %cst {dimension_numbers = #tpu.dot_dimension_numbers<[1], [0], [0], [1], [0, 0, 1, 1], [], []>} : vector<8x16xbf16>, vector<16x128xbf16>, vector<8x128xf32> -> vector<8x128xf32>
    %c16 = arith.constant 16 : index
    %c0_3 = arith.constant 0 : index
    %5 = vector.load %arg1[%c16, %c0_3] : memref<432x128xf32, #tpu.memory_space<vmem>>, vector<1x128xf32>
    %6 = vector.broadcast %5 : vector<1x128xf32> to vector<8x128xf32>
    %7 = arith.addf %4, %6 : vector<8x128xf32>
    %cst_4 = arith.constant 0.000000e+00 : f32
    %8 = vector.broadcast %cst_4 : f32 to vector<8x128xf32>
    %9 = arith.maximumf %7, %8 : vector<8x128xf32>
    %c24 = arith.constant 24 : index
    %c0_5 = arith.constant 0 : index
    %10 = vector.load %arg1[%c24, %c0_5] : memref<432x128xf32, #tpu.memory_space<vmem>>, vector<128x128xf32>
    %11 = arith.truncf %10 : vector<128x128xf32> to vector<128x128xbf16>
    %12 = arith.truncf %9 : vector<8x128xf32> to vector<8x128xbf16>
    %cst_6 = arith.constant dense<0.000000e+00> : vector<8x128xf32>
    %13 = tpu.matmul %12, %11, %cst_6 {dimension_numbers = #tpu.dot_dimension_numbers<[1], [0], [0], [1], [0, 0, 1, 1], [], []>} : vector<8x128xbf16>, vector<128x128xbf16>, vector<8x128xf32> -> vector<8x128xf32>
    %c152 = arith.constant 152 : index
    %c0_7 = arith.constant 0 : index
    %14 = vector.load %arg1[%c152, %c0_7] : memref<432x128xf32, #tpu.memory_space<vmem>>, vector<1x128xf32>
    %15 = vector.broadcast %14 : vector<1x128xf32> to vector<8x128xf32>
    %16 = arith.addf %13, %15 : vector<8x128xf32>
    %cst_8 = arith.constant 0.000000e+00 : f32
    %17 = vector.broadcast %cst_8 : f32 to vector<8x128xf32>
    %18 = arith.maximumf %16, %17 : vector<8x128xf32>
    %c160 = arith.constant 160 : index
    %c0_9 = arith.constant 0 : index
    %19 = vector.load %arg1[%c160, %c0_9] : memref<432x128xf32, #tpu.memory_space<vmem>>, vector<128x128xf32>
    %20 = arith.truncf %19 : vector<128x128xf32> to vector<128x128xbf16>
    %21 = arith.truncf %18 : vector<8x128xf32> to vector<8x128xbf16>
    %cst_10 = arith.constant dense<0.000000e+00> : vector<8x128xf32>
    %22 = tpu.matmul %21, %20, %cst_10 {dimension_numbers = #tpu.dot_dimension_numbers<[1], [0], [0], [1], [0, 0, 1, 1], [], []>} : vector<8x128xbf16>, vector<128x128xbf16>, vector<8x128xf32> -> vector<8x128xf32>
    %c288 = arith.constant 288 : index
    %c0_11 = arith.constant 0 : index
    %23 = vector.load %arg1[%c288, %c0_11] : memref<432x128xf32, #tpu.memory_space<vmem>>, vector<1x128xf32>
    %24 = vector.broadcast %23 : vector<1x128xf32> to vector<8x128xf32>
    %25 = arith.addf %22, %24 : vector<8x128xf32>
    %cst_12 = arith.constant 0.000000e+00 : f32
    %26 = vector.broadcast %cst_12 : f32 to vector<8x128xf32>
    %27 = arith.maximumf %25, %26 : vector<8x128xf32>
    %c296 = arith.constant 296 : index
    %c0_13 = arith.constant 0 : index
    %28 = vector.load %arg1[%c296, %c0_13] : memref<432x128xf32, #tpu.memory_space<vmem>>, vector<128x128xf32>
    %29 = arith.truncf %28 : vector<128x128xf32> to vector<128x128xbf16>
    %30 = arith.truncf %27 : vector<8x128xf32> to vector<8x128xbf16>
    %cst_14 = arith.constant dense<0.000000e+00> : vector<8x128xf32>
    %31 = tpu.matmul %30, %29, %cst_14 {dimension_numbers = #tpu.dot_dimension_numbers<[1], [0], [0], [1], [0, 0, 1, 1], [], []>} : vector<8x128xbf16>, vector<128x128xbf16>, vector<8x128xf32> -> vector<8x128xf32>
    %c424 = arith.constant 424 : index
    %c0_15 = arith.constant 0 : index
    %32 = vector.load %arg1[%c424, %c0_15] : memref<432x128xf32, #tpu.memory_space<vmem>>, vector<1x128xf32>
    %33 = vector.broadcast %32 : vector<1x128xf32> to vector<8x128xf32>
    %34 = arith.addf %31, %33 : vector<8x128xf32>
    %c0_16 = arith.constant 0 : index
    %c0_17 = arith.constant 0 : index
    %35 = vector.load %arg2[%c0_16, %c0_17] : memref<8x128xf32, #tpu.memory_space<vmem>>, vector<8x128xf32>
    tpu.vector_store %arg2[%c0_16, %c0_17], %34 {strides = array<i32>} : memref<8x128xf32, #tpu.memory_space<vmem>>, vector<8x128xf32>,
    return
  }
}

</mosaic_0001>

<llo_original>
// kernel: tpu_custom_call.1
$region0: #{tpu_custom_call.1}
  #allocation0 [shape = 'u32[]', space=smem, size = 0x4, offset = 0x4, fixed_abs, tag = 'smem constant byte address 0x4 - core index']
  #allocation1 [shape = 'u32[144,128]{1,0:T(1,128)}', space=vmem, size = 0x12000, scoped, tag = 'internal scratch']
  %s0 = inlined_call_operand.hbm [shape: f32[8,16], index: 0, kind: input, shape index: {}]
  %s1 = inlined_call_operand.hbm [shape: f32[432,128], index: 1, kind: input, shape index: {}]
  %s2 = inlined_call_operand.hbm [shape: f32[8,128], index: 2, kind: output, shape index: {}]
  %s3 = sld [smem:[#allocation0]]
  $region26: #{tpu_custom_call.1} parent=0
    _
  %s5 = ssub.s32 1, %s3
  %s6 = scalar_select 0, %s5, %s3
  $region1: #{tpu_custom_call.1} parent=0
    #allocation2 [shape = 'u8[4096]{0}', space=vmem, size = 0x1000, scoped, tag = 'input window, operand 0, single buffered']
    #allocation3 [shape = 's32[1]{0}', space=sflag, size = 0x4, scoped, tag = 'scoped memory for tpu_custom_call.1']
    #allocation4 [shape = 's32[1]{0}', space=sflag, size = 0x4, scoped, tag = 'scoped memory for tpu_custom_call.1']
    #allocation5 [shape = 'u8[221184]{0}', space=vmem, size = 0x36000, scoped, tag = 'input window, operand 1, single buffered']
    #allocation6 [shape = 's32[1]{0}', space=sflag, size = 0x4, scoped, tag = 'scoped memory for tpu_custom_call.1']
    #allocation7 [shape = 'u8[4096]{0}', space=vmem, size = 0x1000, scoped, tag = 'output window, operand 0, single buffered']
    %7 = vsyncpa [#allocation3], 0
    %8 = vsyncpa [#allocation6], 0
    %9 = vsyncpa [#allocation4], 0
    // Predicated region
    $region2: #{tpu_custom_call.1} parent=1 // pred_check
      _
    $region3: #{tpu_custom_call.1} parent=1 // pred_check_branch
      %11 = sbr.rel (0) target = $region5
    $region4: #{tpu_custom_call.1} parent=1 // pred_region
      %s13 = ssub.s32 128, 128
      %14 = vsyncadd [#allocation3], %s13
      %s16 = sshll.u32 [#allocation2], 4
      %s17 = int_to_ptr.vmem [resolvable:$true] %s16
      %19 = dma.hbm_to_vmem [thread:$0]  %s0, 128, %s17, [#allocation3]
    $region5: #{tpu_custom_call.1} parent=1 // pred_fallthru
      _
    // Predicated region
    $region6: #{tpu_custom_call.1} parent=1 // pred_check
      _
    $region7: #{tpu_custom_call.1} parent=1 // pred_check_branch
      %21 = sbr.rel (0) target = $region9
    $region8: #{tpu_custom_call.1} parent=1 // pred_region
      %s23 = ssub.s32 6912, 6912
      %24 = vsyncadd [#allocation6], %s23
      %s25 = sshll.u32 [#allocation5], 4
      %s26 = int_to_ptr.vmem [resolvable:$true] %s25
      %31 = dma.hbm_to_vmem [thread:$0]  %s1, 6912, %s26, [#allocation6], 128, 128, 8
    $region9: #{tpu_custom_call.1} parent=1 // pred_fallthru
      _
    // Predicated region
    $region10: #{tpu_custom_call.1} parent=1 // pred_check
      _
    $region11: #{tpu_custom_call.1} parent=1 // pred_check_branch
      %33 = sbr.rel (0) target = $region13
    $region12: #{tpu_custom_call.1} parent=1 // pred_region
      %34 = dma.done [#allocation3], 128
    $region13: #{tpu_custom_call.1} parent=1 // pred_fallthru
      _
    // Predicated region
    $region14: #{tpu_custom_call.1} parent=1 // pred_check
      _
    $region15: #{tpu_custom_call.1} parent=1 // pred_check_branch
      %36 = sbr.rel (0) target = $region17
    $region16: #{tpu_custom_call.1} parent=1 // pred_region
      %37 = dma.done [#allocation6], 6912
    $region17: #{tpu_custom_call.1} parent=1 // pred_fallthru
      _
    %v39 = vld [vmem:[#allocation2] sm:$0xff]
    %v40 = vpack.c.bf16 %v39, %v39
    %v41 = vld [vmem:[#allocation5] sm:$0xff]
    %v42 = vld [vmem:[#allocation5 + $0x8] sm:$0xff]
    %v43 = vpack.c.bf16 %v42, %v41
    %v44 = vld [vmem:[#allocation5 + $0x10] sm:$0x1]
    %v45 = vlaneseq
    %v46 = vshrl.u32 %v45, 7
    %v47 = vsub.s32 0, %v46
    %v48 = vrot.slane %v44, %v47
    %vm49 = vcmask 130048
    %v51 = vsel %vm49, %v40, 0
    %53 = vmatprep.subr.bf16.mxu0 0
    %54 = vmatpush1.bf16.msra.mxu0 %v43
    %55 = vmatprep.subr.bf16.mxu0 0
    %56 = vmatpush1.bf16.msra.mxu0 0
    %57 = vmatprep.subr.bf16.mxu0 0
    %58 = vmatpush1.bf16.msra.mxu0 0
    %59 = vmatprep.subr.bf16.mxu0 0
    %60 = vmatpush1.bf16.msra.mxu0 0
    %61 = vmatprep.subr.bf16.mxu0 0
    %62 = vmatpush1.bf16.msra.mxu0 0
    %63 = vmatprep.subr.bf16.mxu0 0
    %64 = vmatpush1.bf16.msra.mxu0 0
    %65 = vmatprep.subr.bf16.mxu0 0
    %66 = vmatpush1.bf16.msra.mxu0 0
    %67 = vmatprep.subr.bf16.mxu0 0
    %68 = vmatpush1.bf16.msra.mxu0 0
    %69 = vmatprep.subr.bf16.mxu0 0
    %70 = vmatpush1.bf16.msra.mxu0 0
    %71 = vmatprep.subr.bf16.mxu0 0
    %72 = vmatpush1.bf16.msra.mxu0 0
    %73 = vmatprep.subr.bf16.mxu0 0
    %74 = vmatpush1.bf16.msra.mxu0 0
    %75 = vmatprep.subr.bf16.mxu0 0
    %76 = vmatpush1.bf16.msra.mxu0 0
    %77 = vmatprep.subr.bf16.mxu0 0
    %78 = vmatpush1.bf16.msra.mxu0 0
    %79 = vmatprep.subr.bf16.mxu0 0
    %80 = vmatpush1.bf16.msra.mxu0 0
    %81 = vmatprep.subr.bf16.mxu0 0
    %82 = vmatpush1.bf16.msra.mxu0 0
    %83 = vmatprep.subr.bf16.mxu0 0
    %84 = vmatpush1.bf16.msra.mxu0 0
    %85 = vmatprep.mubr.bf16.mxu0 0
    %86 = vmatmul.mubr.bf16.gmra.mrb[0].mxu0 %v51
    %v87 = vpop.f32.mrb[0].mxu0
    %v88 = vadd.f32 %v48, %v87
    %v89 = vpop.f32.mrb[0].mxu0
    %v90 = vpop.f32.mrb[0].mxu0
    %v91 = vpop.f32.mrb[0].mxu0
    %92 = vdwg.mxu0
    %v93 = vmax.f32 %v88, 0.0
    %v94 = vld [vmem:[#allocation5 + $0x18] sm:$0xff]
    %v95 = vld [vmem:[#allocation5 + $0x20] sm:$0xff]
    %v96 = vld [vmem:[#allocation5 + $0x28] sm:$0xff]
    %v97 = vld [vmem:[#allocation5 + $0x30] sm:$0xff]
    %v98 = vld [vmem:[#allocation5 + $0x38] sm:$0xff]
    %v99 = vld [vmem:[#allocation5 + $0x40] sm:$0xff]
    %v100 = vld [vmem:[#allocation5 + $0x48] sm:$0xff]
    %v101 = vld [vmem:[#allocation5 + $0x50] sm:$0xff]
    %v102 = vld [vmem:[#allocation5 + $0x58] sm:$0xff]
    %v103 = vld [vmem:[#allocation5 + $0x60] sm:$0xff]
    %v104 = vld [vmem:[#allocation5 + $0x68] sm:$0xff]
    %v105 = vld [vmem:[#allocation5 + $0x70] sm:$0xff]
    %v106 = vld [vmem:[#allocation5 + $0x78] sm:$0xff]
    %v107 = vld [vmem:[#allocation5 + $0x80] sm:$0xff]
    %v108 = vld [vmem:[#allocation5 + $0x88] sm:$0xff]
    %v109 = vld [vmem:[#allocation5 + $0x90] sm:$0xff]
    %v110 = vpack.c.bf16 %v95, %v94
    %v111 = vpack.c.bf16 %v97, %v96
    %v112 = vpack.c.bf16 %v99, %v98
    %v113 = vpack.c.bf16 %v101, %v100
    %v114 = vpack.c.bf16 %v103, %v102
    %v115 = vpack.c.bf16 %v105, %v104
    %v116 = vpack.c.bf16 %v107, %v106
    %v117 = vpack.c.bf16 %v109, %v108
    %v118 = vpack.c.bf16 %v93, %v93
    %v119 = vld [vmem:[#allocation5 + $0x98] sm:$0x1]
    %v120 = vlaneseq
    %v121 = vshrl.u32 %v120, 7
    %v122 = vsub.s32 0, %v121
    %v123 = vrot.slane %v119, %v122
    %124 = vmatprep.subr.bf16.mxu0 0
    %125 = vmatpush1.bf16.msra.mxu0 %v110
    %126 = vmatprep.subr.bf16.mxu0 0
    %127 = vmatpush1.bf16.msra.mxu0 %v111
    %128 = vmatprep.subr.bf16.mxu0 0
    %129 = vmatpush1.bf16.msra.mxu0 %v112
    %130 = vmatprep.subr.bf16.mxu0 0
    %131 = vmatpush1.bf16.msra.mxu0 %v113
    %132 = vmatprep.subr.bf16.mxu0 0
    %133 = vmatpush1.bf16.msra.mxu0 %v114
    %134 = vmatprep.subr.bf16.mxu0 0
    %135 = vmatpush1.bf16.msra.mxu0 %v115
    %136 = vmatprep.subr.bf16.mxu0 0
    %137 = vmatpush1.bf16.msra.mxu0 %v116
    %138 = vmatprep.subr.bf16.mxu0 0
    %139 = vmatpush1.bf16.msra.mxu0 %v117
    %140 = vmatprep.subr.bf16.mxu0 0
    %141 = vmatpush1.bf16.msra.mxu0 0
    %142 = vmatprep.subr.bf16.mxu0 0
    %143 = vmatpush1.bf16.msra.mxu0 0
    %144 = vmatprep.subr.bf16.mxu0 0
    %145 = vmatpush1.bf16.msra.mxu0 0
    %146 = vmatprep.subr.bf16.mxu0 0
    %147 = vmatpush1.bf16.msra.mxu0 0
    %148 = vmatprep.subr.bf16.mxu0 0
    %149 = vmatpush1.bf16.msra.mxu0 0
    %150 = vmatprep.subr.bf16.mxu0 0
    %151 = vmatpush1.bf16.msra.mxu0 0
    %152 = vmatprep.subr.bf16.mxu0 0
    %153 = vmatpush1.bf16.msra.mxu0 0
    %154 = vmatprep.subr.bf16.mxu0 0
    %155 = vmatpush1.bf16.msra.mxu0 0
    %156 = vmatprep.mubr.bf16.mxu0 0
    %157 = vmatmul.mubr.bf16.gmra.mrb[0].mxu0 %v118
    %v158 = vpop.f32.mrb[0].mxu0
    %v159 = vadd.f32 %v123, %v158
    %v160 = vpop.f32.mrb[0].mxu0
    %v161 = vpop.f32.mrb[0].mxu0
    %v162 = vpop.f32.mrb[0].mxu0
    %163 = vdwg.mxu0
    %v164 = vmax.f32 %v159, 0.0
    %v165 = vld [vmem:[#allocation5 + $0xa0] sm:$0xff]
    %v166 = vld [vmem:[#allocation5 + $0xa8] sm:$0xff]
    %v167 = vld [vmem:[#allocation5 + $0xb0] sm:$0xff]
    %v168 = vld [vmem:[#allocation5 + $0xb8] sm:$0xff]
    %v169 = vld [vmem:[#allocation5 + $0xc0] sm:$0xff]
    %v170 = vld [vmem:[#allocation5 + $0xc8] sm:$0xff]
    %v171 = vld [vmem:[#allocation5 + $0xd0] sm:$0xff]
    %v172 = vld [vmem:[#allocation5 + $0xd8] sm:$0xff]
    %v173 = vld [vmem:[#allocation5 + $0xe0] sm:$0xff]
    %v174 = vld [vmem:[#allocation5 + $0xe8] sm:$0xff]
    %v175 = vld [vmem:[#allocation5 + $0xf0] sm:$0xff]
    %v176 = vld [vmem:[#allocation5 + $0xf8] sm:$0xff]
    %v177 = vld [vmem:[#allocation5 + $0x100] sm:$0xff]
    %v178 = vld [vmem:[#allocation5 + $0x108] sm:$0xff]
    %v179 = vld [vmem:[#allocation5 + $0x110] sm:$0xff]
    %v180 = vld [vmem:[#allocation5 + $0x118] sm:$0xff]
    %v181 = vpack.c.bf16 %v166, %v165
    %v182 = vpack.c.bf16 %v168, %v167
    %v183 = vpack.c.bf16 %v170, %v169
    %v184 = vpack.c.bf16 %v172, %v171
    %v185 = vpack.c.bf16 %v174, %v173
    %v186 = vpack.c.bf16 %v176, %v175
    %v187 = vpack.c.bf16 %v178, %v177
    %v188 = vpack.c.bf16 %v180, %v179
    %v189 = vpack.c.bf16 %v164, %v164
    %v190 = vld [vmem:[#allocation5 + $0x120] sm:$0x1]
    %v191 = vlaneseq
    %v192 = vshrl.u32 %v191, 7
    %v193 = vsub.s32 0, %v192
    %v194 = vrot.slane %v190, %v193
    %195 = vmatprep.subr.bf16.mxu0 0
    %196 = vmatpush1.bf16.msra.mxu0 %v181
    %197 = vmatprep.subr.bf16.mxu0 0
    %198 = vmatpush1.bf16.msra.mxu0 %v182
    %199 = vmatprep.subr.bf16.mxu0 0
    %200 = vmatpush1.bf16.msra.mxu0 %v183
    %201 = vmatprep.subr.bf16.mxu0 0
    %202 = vmatpush1.bf16.msra.mxu0 %v184
    %203 = vmatprep.subr.bf16.mxu0 0
    %204 = vmatpush1.bf16.msra.mxu0 %v185
    %205 = vmatprep.subr.bf16.mxu0 0
    %206 = vmatpush1.bf16.msra.mxu0 %v186
    %207 = vmatprep.subr.bf16.mxu0 0
    %208 = vmatpush1.bf16.msra.mxu0 %v187
    %209 = vmatprep.subr.bf16.mxu0 0
    %210 = vmatpush1.bf16.msra.mxu0 %v188
    %211 = vmatprep.subr.bf16.mxu0 0
    %212 = vmatpush1.bf16.msra.mxu0 0
    %213 = vmatprep.subr.bf16.mxu0 0
    %214 = vmatpush1.bf16.msra.mxu0 0
    %215 = vmatprep.subr.bf16.mxu0 0
    %216 = vmatpush1.bf16.msra.mxu0 0
    %217 = vmatprep.subr.bf16.mxu0 0
    %218 = vmatpush1.bf16.msra.mxu0 0
    %219 = vmatprep.subr.bf16.mxu0 0
    %220 = vmatpush1.bf16.msra.mxu0 0
    %221 = vmatprep.subr.bf16.mxu0 0
    %222 = vmatpush1.bf16.msra.mxu0 0
    %223 = vmatprep.subr.bf16.mxu0 0
    %224 = vmatpush1.bf16.msra.mxu0 0
    %225 = vmatprep.subr.bf16.mxu0 0
    %226 = vmatpush1.bf16.msra.mxu0 0
    %227 = vmatprep.mubr.bf16.mxu0 0
    %228 = vmatmul.mubr.bf16.gmra.mrb[0].mxu0 %v189
    %v229 = vpop.f32.mrb[0].mxu0
    %v230 = vadd.f32 %v194, %v229
    %v231 = vpop.f32.mrb[0].mxu0
    %v232 = vpop.f32.mrb[0].mxu0
    %v233 = vpop.f32.mrb[0].mxu0
    %234 = vdwg.mxu0
    %v235 = vmax.f32 %v230, 0.0
    %v236 = vld [vmem:[#allocation5 + $0x128] sm:$0xff]
    %v237 = vld [vmem:[#allocation5 + $0x130] sm:$0xff]
    %v238 = vld [vmem:[#allocation5 + $0x138] sm:$0xff]
    %v239 = vld [vmem:[#allocation5 + $0x140] sm:$0xff]
    %v240 = vld [vmem:[#allocation5 + $0x148] sm:$0xff]
    %v241 = vld [vmem:[#allocation5 + $0x150] sm:$0xff]
    %v242 = vld [vmem:[#allocation5 + $0x158] sm:$0xff]
    %v243 = vld [vmem:[#allocation5 + $0x160] sm:$0xff]
    %v244 = vld [vmem:[#allocation5 + $0x168] sm:$0xff]
    %v245 = vld [vmem:[#allocation5 + $0x170] sm:$0xff]
    %v246 = vld [vmem:[#allocation5 + $0x178] sm:$0xff]
    %v247 = vld [vmem:[#allocation5 + $0x180] sm:$0xff]
    %v248 = vld [vmem:[#allocation5 + $0x188] sm:$0xff]
    %v249 = vld [vmem:[#allocation5 + $0x190] sm:$0xff]
    %v250 = vld [vmem:[#allocation5 + $0x198] sm:$0xff]
    %v251 = vld [vmem:[#allocation5 + $0x1a0] sm:$0xff]
    %v252 = vpack.c.bf16 %v237, %v236
    %v253 = vpack.c.bf16 %v239, %v238
    %v254 = vpack.c.bf16 %v241, %v240
    %v255 = vpack.c.bf16 %v243, %v242
    %v256 = vpack.c.bf16 %v245, %v244
    %v257 = vpack.c.bf16 %v247, %v246
    %v258 = vpack.c.bf16 %v249, %v248
    %v259 = vpack.c.bf16 %v251, %v250
    %v260 = vpack.c.bf16 %v235, %v235
    %v261 = vld [vmem:[#allocation5 + $0x1a8] sm:$0x1]
    %v262 = vlaneseq
    %v263 = vshrl.u32 %v262, 7
    %v264 = vsub.s32 0, %v263
    %v265 = vrot.slane %v261, %v264
    %266 = vmatprep.subr.bf16.mxu0 0
    %267 = vmatpush1.bf16.msra.mxu0 %v252
    %268 = vmatprep.subr.bf16.mxu0 0
    %269 = vmatpush1.bf16.msra.mxu0 %v253
    %270 = vmatprep.subr.bf16.mxu0 0
    %271 = vmatpush1.bf16.msra.mxu0 %v254
    %272 = vmatprep.subr.bf16.mxu0 0
    %273 = vmatpush1.bf16.msra.mxu0 %v255
    %274 = vmatprep.subr.bf16.mxu0 0
    %275 = vmatpush1.bf16.msra.mxu0 %v256
    %276 = vmatprep.subr.bf16.mxu0 0
    %277 = vmatpush1.bf16.msra.mxu0 %v257
    %278 = vmatprep.subr.bf16.mxu0 0
    %279 = vmatpush1.bf16.msra.mxu0 %v258
    %280 = vmatprep.subr.bf16.mxu0 0
    %281 = vmatpush1.bf16.msra.mxu0 %v259
    %282 = vmatprep.subr.bf16.mxu0 0
    %283 = vmatpush1.bf16.msra.mxu0 0
    %284 = vmatprep.subr.bf16.mxu0 0
    %285 = vmatpush1.bf16.msra.mxu0 0
    %286 = vmatprep.subr.bf16.mxu0 0
    %287 = vmatpush1.bf16.msra.mxu0 0
    %288 = vmatprep.subr.bf16.mxu0 0
    %289 = vmatpush1.bf16.msra.mxu0 0
    %290 = vmatprep.subr.bf16.mxu0 0
    %291 = vmatpush1.bf16.msra.mxu0 0
    %292 = vmatprep.subr.bf16.mxu0 0
    %293 = vmatpush1.bf16.msra.mxu0 0
    %294 = vmatprep.subr.bf16.mxu0 0
    %295 = vmatpush1.bf16.msra.mxu0 0
    %296 = vmatprep.subr.bf16.mxu0 0
    %297 = vmatpush1.bf16.msra.mxu0 0
    %298 = vmatprep.mubr.bf16.mxu0 0
    %299 = vmatmul.mubr.bf16.gmra.mrb[0].mxu0 %v260
    %v300 = vpop.f32.mrb[0].mxu0
    %v301 = vadd.f32 %v265, %v300
    %v302 = vpop.f32.mrb[0].mxu0
    %v303 = vpop.f32.mrb[0].mxu0
    %v304 = vpop.f32.mrb[0].mxu0
    %305 = vdwg.mxu0
    %306 = vst [vmem:[#allocation7] sm:$0xff] %v301
    // Predicated region
    $region18: #{tpu_custom_call.1} parent=1 // pred_check
      _
    $region19: #{tpu_custom_call.1} parent=1 // pred_check_branch
      %308 = sbr.rel (0) target = $region21
    $region20: #{tpu_custom_call.1} parent=1 // pred_region
      %s310 = ssub.s32 128, 128
      %311 = vsyncadd [#allocation4], %s310
      %s313 = sshll.u32 [#allocation7], 4
      %s314 = int_to_ptr.vmem [resolvable:$true] %s313
      %316 = dma.vmem_to_hbm [thread:$0]  %s314, 128, %s2, [#allocation4]
    $region21: #{tpu_custom_call.1} parent=1 // pred_fallthru
      _
    // Predicated region
    $region22: #{tpu_custom_call.1} parent=1 // pred_check
      _
    $region23: #{tpu_custom_call.1} parent=1 // pred_check_branch
      %318 = sbr.rel (0) target = $region25
    $region24: #{tpu_custom_call.1} parent=1 // pred_region
      %319 = dma.done [#allocation4], 128
    $region25: #{tpu_custom_call.1} parent=1 // pred_fallthru
      _
    %320 = vsyncpa [#allocation3], 1
    %321 = vsyncpa [#allocation6], 1
    %322 = vsyncpa [#allocation4], 1

</llo_original>
